<compile_context>
chip_gen: v7x
topology: tpu7x:2x2x1
jax: 0.10.0
libtpu: 0.0.40
codegen_flags: <defaults>
</compile_context>

<pallas_src>
import math

import numpy as np
import jax
import jax.numpy as jnp
from jax import lax
from jax.experimental import pallas as pl
from jax.experimental.pallas import tpu as pltpu


def _make_triplet_kernel(N, k_per_block):
    A = k_per_block

    def kernel(sim_ref, gt_ref, out_ref, acc_ref):
        # sim_ref / gt_ref: (N, N) f32, symmetric, resident (same block every grid step)
        # out_ref: (1, 8, 128) f32 lane-dense partial sum for this k-block
        # acc_ref: (N, N) f32 VMEM accumulator; plane indexed [j (sublane), i (lane)]
        b = pl.program_id(0)
        base = b * A

        SIM = sim_ref[...]          # SIM[j, i] == sim[i, j]  (symmetry)
        GT = gt_ref[...]            # GT[j, i]  == gt[i, j]

        jj = lax.broadcasted_iota(jnp.int32, (N, 1), 0)   # positive index j (sublane)
        ii = lax.broadcasted_iota(jnp.int32, (1, N), 1)   # anchor index i (lane)
        mask_ij = jj != ii                                # loop-invariant

        acc_ref[...] = jnp.zeros_like(acc_ref)

        @pl.loop(0, A, unroll=(True if A <= 16 else False))
        def _(t):
            k = base + t

            @pl.when(k < N)          # skip padded k's in the ragged last block (scalar-level)
            def _():
                srow = sim_ref[pl.ds(k, 1), :]     # (1, N): sim[k, i] == sim[i, k]
                grow = gt_ref[pl.ds(k, 1), :]      # (1, N): gt[i, k]
                flag = GT - grow                   # gt[i, j] - gt[i, k]        over [j, i]
                u = (SIM - srow) - flag            # sim[i, j] - sim[i, k] - flag
                trip = jnp.maximum(jnp.where(flag < 0.0, u, -u), 0.0)
                valid = mask_ij & (jj > k) & (ii != k)     # i != j, k < j, k != i
                acc_ref[...] += jnp.where(valid, trip, 0.0)

        partial = jnp.sum(jnp.sum(acc_ref[...], axis=1, keepdims=True),
                          axis=0, keepdims=True)            # (1, 1)
        out_ref[...] = jnp.broadcast_to(partial, out_ref.shape)

    return kernel


def place_distance_loss(embeddings, coords, margin=0.1):
    """JAX/Pallas equivalent of PlaceDistanceLoss(margin)(embeddings, coords, device).
    `margin` kept for API parity; the reference forward never uses it.
    Note: N < 3 gives num_triplets == 0 and a non-finite result, same as the reference."""
    embeddings = embeddings.astype(jnp.float32)
    coords = coords.astype(jnp.float32)
    N, D = embeddings.shape

    # ---- hoisted prep (computed once, plain JAX; O(N^2 D) vs the kernel's O(N^3)) --------
    # haversine distances / pi (symmetric)
    rad = jnp.deg2rad(coords)
    lat, lon = rad[:, 0], rad[:, 1]
    dlat = lat[:, None] - lat[None, :]
    dlon = lon[:, None] - lon[None, :]
    a = (jnp.sin(dlat / 2.0) ** 2
         + jnp.cos(lat)[:, None] * jnp.cos(lat)[None, :] * jnp.sin(dlon / 2.0) ** 2)
    c = 2.0 * jnp.arctan2(jnp.sqrt(a), jnp.sqrt(1.0 - a))
    d = (c / math.pi).astype(jnp.float32)

    # unbiased sigma via centered two-pass form (stable for geographically clustered batches)
    mean = jnp.mean(d)
    var = jnp.sum((d - mean) ** 2) / (d.size - 1.0)          # sigma^2, ddof=1
    gt = jnp.exp(-(d * d) / (2.0 * var)).astype(jnp.float32)

    # cosine similarities: bf16 operands (MXU-native on all generations), f32 accumulation.
    # Note: torch F.cosine_similarity clamps the *product* of norms at 1e-8; we clamp each
    # norm — identical except for near-zero embeddings.
    nrm = jnp.sqrt(jnp.sum(embeddings * embeddings, axis=1, keepdims=True))
    en = (embeddings / jnp.maximum(nrm, 1e-8)).astype(jnp.bfloat16)
    sim = jnp.dot(en, en.T, preferred_element_type=jnp.float32).astype(jnp.float32)

    # ---- Pallas O(N^3) triplet reduction, gridded over k-blocks ---------------------------
    A = min(N, 64)                 # k-block size; <=64 keeps megacore balance on v7x
    G = -(-N // A)

    per_mat = 4 * N * N
    need = 12 * per_mat + (4 << 20)   # sim+gt (worst-case double-buffered) + acc + temporaries
    try:
        phys = int(pltpu.get_tpu_info().vmem_capacity_bytes)
    except Exception:
        phys = 64 * 1024 * 1024       # conservative fallback (v7x per-TensorCore)
    vmem_bytes = max(min(need, int(0.75 * phys)), 16 * 1024 * 1024)

    out = pl.pallas_call(
        _make_triplet_kernel(N, A),
        out_shape=jax.ShapeDtypeStruct((G, 8, 128), jnp.float32),
        grid_spec=pltpu.PrefetchScalarGridSpec(
            num_scalar_prefetch=0,
            grid=(G,),
            in_specs=[
                pl.BlockSpec((N, N), lambda b: (0, 0)),   # sim, resident
                pl.BlockSpec((N, N), lambda b: (0, 0)),   # gt,  resident
            ],
            out_specs=pl.BlockSpec((1, 8, 128), lambda b: (b, 0, 0)),  # lane-dense partials
            scratch_shapes=[
                pltpu.VMEM((N, N), jnp.float32),          # per-block accumulator
            ],
        ),
        compiler_params=pltpu.CompilerParams(
            dimension_semantics=("parallel",),
            vmem_limit_bytes=vmem_bytes,
        ),
    )(sim, gt)

    num_triplets = N * (N - 1) * (N - 2) / 2.0
    return jnp.sum(out[:, 0, 0]) / num_triplets


def _reference_loss(emb, coords):
    """Pure numpy mirror of the PyTorch forward (float64), including the triple loop."""
    N = emb.shape[0]
    rad = np.deg2rad(coords.astype(np.float64))
    lat, lon = rad[:, 0], rad[:, 1]
    dlat = lat[:, None] - lat[None, :]
    dlon = lon[:, None] - lon[None, :]
    a = np.sin(dlat / 2.0) ** 2 + np.cos(lat)[:, None] * np.cos(lat)[None, :] * np.sin(dlon / 2.0) ** 2
    c = 2.0 * np.arctan2(np.sqrt(a), np.sqrt(1.0 - a))
    d = c / math.pi
    nrm = np.maximum(np.linalg.norm(emb.astype(np.float64), axis=1, keepdims=True), 1e-8)
    en = emb.astype(np.float64) / nrm
    sim = en @ en.T
    sigma = np.std(d, ddof=1)
    gt = np.exp(-d ** 2 / (2.0 * sigma ** 2))
    loss = 0.0
    for i in range(N):
        for j in range(N):
            if i == j:
                continue
            for k in range(j):
                if k == i or k == j:
                    continue
                flag = gt[i, j] - gt[i, k]
                if flag < 0:
                    loss += max(sim[i, j] - sim[i, k] - flag, 0.0)
                else:
                    loss += max(sim[i, k] - sim[i, j] + flag, 0.0)
    return loss / (N * (N - 1) * (N - 2) / 2.0)


if __name__ == "__main__":
    key = jax.random.PRNGKey(0)
    k1, k2, k3 = jax.random.split(key, 3)

    N, D = 8, 32  # small shapes consistent with the module (batch of N embeddings + lat/lon)
    embeddings = jax.random.normal(k1, (N, D), dtype=jnp.float32)
    lat_deg = jax.random.uniform(k2, (N,), minval=-60.0, maxval=60.0)
    lon_deg = jax.random.uniform(k3, (N,), minval=-180.0, maxval=180.0)
    coords = jnp.stack([lat_deg, lon_deg], axis=1).astype(jnp.float32)

    loss = place_distance_loss(embeddings, coords, margin=0.1)
    loss = jax.block_until_ready(loss)

    ref = _reference_loss(np.asarray(embeddings), np.asarray(coords))
    assert np.isfinite(float(loss)), "kernel produced non-finite loss"
    assert abs(float(loss) - ref) < 3e-2, (float(loss), ref)

    print("KERNEL_OK")
</pallas_src>

<mosaic_0001>
module attributes {stable_mosaic.version = 11 : i64} {
  func.func @kernel(%arg0: i32, %arg1: memref<8x8xf32, #tpu.memory_space<vmem>>, %arg2: memref<8x8xf32, #tpu.memory_space<vmem>>, %arg3: memref<1x8x128xf32, #tpu.memory_space<vmem>>, %arg4: memref<8x8xf32, #tpu.memory_space<vmem>>) attributes {dimension_semantics = [#tpu.dimension_semantics<parallel>], iteration_bounds = array<i64: 1>, scalar_prefetch = 0 : i64, scratch_operands = 1 : i64, tpu.core_type = #tpu.core_type<tc>, window_params = [{pipeline_mode = #tpu.pipeline_mode<synchronous>, transform_indices = @transform_0, window_bounds = array<i64: 8, 8>}, {pipeline_mode = #tpu.pipeline_mode<synchronous>, transform_indices = @transform_1, window_bounds = array<i64: 8, 8>}, {transform_indices = @transform_2, window_bounds = array<i64: 1, 8, 128>}]} {
    %c8_i32 = arith.constant 8 : i32
    %0 = arith.muli %arg0, %c8_i32 : i32
    %c0 = arith.constant 0 : index
    %c0_0 = arith.constant 0 : index
    %1 = vector.load %arg1[%c0, %c0_0] : memref<8x8xf32, #tpu.memory_space<vmem>>, vector<8x8xf32>
    %c0_1 = arith.constant 0 : index
    %c0_2 = arith.constant 0 : index
    %2 = vector.load %arg2[%c0_1, %c0_2] : memref<8x8xf32, #tpu.memory_space<vmem>>, vector<8x8xf32>
    %3 = tpu.iota {dimensions = array<i32: 0>} : vector<8x1xi32>
    %4 = tpu.iota {dimensions = array<i32: 1>} : vector<1x8xi32>
    %5 = vector.broadcast %3 : vector<8x1xi32> to vector<8x8xi32>
    %6 = vector.broadcast %4 : vector<1x8xi32> to vector<8x8xi32>
    %7 = arith.cmpi ne, %5, %6 : vector<8x8xi32>
    %cst = arith.constant 0.000000e+00 : f32
    %8 = vector.broadcast %cst : f32 to vector<8x8xf32>
    %c0_3 = arith.constant 0 : index
    %c0_4 = arith.constant 0 : index
    %9 = vector.load %arg4[%c0_3, %c0_4] : memref<8x8xf32, #tpu.memory_space<vmem>>, vector<8x8xf32>
    tpu.vector_store %arg4[%c0_3, %c0_4], %8 {strides = array<i32>} : memref<8x8xf32, #tpu.memory_space<vmem>>, vector<8x8xf32>,
    %c0_i32 = arith.constant 0 : i32
    %c1_i32 = arith.constant 1 : i32
    %10 = arith.muli %c0_i32, %c1_i32 : i32
    %c0_i32_5 = arith.constant 0 : i32
    %11 = arith.addi %c0_i32_5, %10 : i32
    %12 = arith.addi %0, %11 : i32
    %c8_i32_6 = arith.constant 8 : i32
    %13 = arith.cmpi slt, %12, %c8_i32_6 : i32
    %14 = arith.extui %13 : i1 to i32
    %c0_i32_7 = arith.constant 0 : i32
    %15 = arith.cmpi ne, %14, %c0_i32_7 : i32
    scf.if %15 {
      %66 = arith.index_cast %12 : i32 to index
      %c0_45 = arith.constant 0 : index
      %67 = vector.load %arg1[%66, %c0_45] : memref<8x8xf32, #tpu.memory_space<vmem>>, vector<1x8xf32>
      %68 = arith.index_cast %12 : i32 to index
      %c0_46 = arith.constant 0 : index
      %69 = vector.load %arg2[%68, %c0_46] : memref<8x8xf32, #tpu.memory_space<vmem>>, vector<1x8xf32>
      %70 = vector.broadcast %69 : vector<1x8xf32> to vector<8x8xf32>
      %71 = arith.subf %2, %70 : vector<8x8xf32>
      %72 = vector.broadcast %67 : vector<1x8xf32> to vector<8x8xf32>
      %73 = arith.subf %1, %72 : vector<8x8xf32>
      %74 = arith.subf %73, %71 : vector<8x8xf32>
      %cst_47 = arith.constant 0.000000e+00 : f32
      %75 = vector.broadcast %cst_47 : f32 to vector<8x8xf32>
      %76 = arith.cmpf olt, %71, %75 : vector<8x8xf32>
      %cst_48 = arith.constant 0.000000e+00 : f32
      %77 = vector.broadcast %cst_48 : f32 to vector<8x8xf32>
      %78 = arith.subf %77, %74 : vector<8x8xf32>
      %79 = arith.select %76, %74, %78 : vector<8x8xi1>, vector<8x8xf32>
      %cst_49 = arith.constant 0.000000e+00 : f32
      %80 = vector.broadcast %cst_49 : f32 to vector<8x8xf32>
      %81 = arith.maximumf %79, %80 : vector<8x8xf32>
      %82 = vector.broadcast %12 : i32 to vector<8x1xi32>
      %83 = arith.cmpi sgt, %3, %82 : vector<8x1xi32>
      %84 = vector.broadcast %83 : vector<8x1xi1> to vector<8x8xi1>
      %85 = arith.andi %7, %84 : vector<8x8xi1>
      %86 = vector.broadcast %12 : i32 to vector<1x8xi32>
      %87 = arith.cmpi ne, %4, %86 : vector<1x8xi32>
      %88 = vector.broadcast %87 : vector<1x8xi1> to vector<8x8xi1>
      %89 = arith.andi %85, %88 : vector<8x8xi1>
      %c0_50 = arith.constant 0 : index
      %c0_51 = arith.constant 0 : index
      %90 = vector.load %arg4[%c0_50, %c0_51] : memref<8x8xf32, #tpu.memory_space<vmem>>, vector<8x8xf32>
      %cst_52 = arith.constant 0.000000e+00 : f32
      %91 = vector.broadcast %cst_52 : f32 to vector<8x8xf32>
      %92 = arith.select %89, %81, %91 : vector<8x8xi1>, vector<8x8xf32>
      %93 = arith.addf %90, %92 : vector<8x8xf32>
      %c0_53 = arith.constant 0 : index
      %c0_54 = arith.constant 0 : index
      %94 = vector.load %arg4[%c0_53, %c0_54] : memref<8x8xf32, #tpu.memory_space<vmem>>, vector<8x8xf32>
      tpu.vector_store %arg4[%c0_53, %c0_54], %93 {strides = array<i32>} : memref<8x8xf32, #tpu.memory_space<vmem>>, vector<8x8xf32>,
    } else {
    }
    %c1_i32_8 = arith.constant 1 : i32
    %c1_i32_9 = arith.constant 1 : i32
    %16 = arith.muli %c1_i32_8, %c1_i32_9 : i32
    %c0_i32_10 = arith.constant 0 : i32
    %17 = arith.addi %c0_i32_10, %16 : i32
    %18 = arith.addi %0, %17 : i32
    %c8_i32_11 = arith.constant 8 : i32
    %19 = arith.cmpi slt, %18, %c8_i32_11 : i32
    %20 = arith.extui %19 : i1 to i32
    %c0_i32_12 = arith.constant 0 : i32
    %21 = arith.cmpi ne, %20, %c0_i32_12 : i32
    scf.if %21 {
      %66 = arith.index_cast %18 : i32 to index
      %c0_45 = arith.constant 0 : index
      %67 = vector.load %arg1[%66, %c0_45] : memref<8x8xf32, #tpu.memory_space<vmem>>, vector<1x8xf32>
      %68 = arith.index_cast %18 : i32 to index
      %c0_46 = arith.constant 0 : index
      %69 = vector.load %arg2[%68, %c0_46] : memref<8x8xf32, #tpu.memory_space<vmem>>, vector<1x8xf32>
      %70 = vector.broadcast %69 : vector<1x8xf32> to vector<8x8xf32>
      %71 = arith.subf %2, %70 : vector<8x8xf32>
      %72 = vector.broadcast %67 : vector<1x8xf32> to vector<8x8xf32>
      %73 = arith.subf %1, %72 : vector<8x8xf32>
      %74 = arith.subf %73, %71 : vector<8x8xf32>
      %cst_47 = arith.constant 0.000000e+00 : f32
      %75 = vector.broadcast %cst_47 : f32 to vector<8x8xf32>
      %76 = arith.cmpf olt, %71, %75 : vector<8x8xf32>
      %cst_48 = arith.constant 0.000000e+00 : f32
      %77 = vector.broadcast %cst_48 : f32 to vector<8x8xf32>
      %78 = arith.subf %77, %74 : vector<8x8xf32>
      %79 = arith.select %76, %74, %78 : vector<8x8xi1>, vector<8x8xf32>
      %cst_49 = arith.constant 0.000000e+00 : f32
      %80 = vector.broadcast %cst_49 : f32 to vector<8x8xf32>
      %81 = arith.maximumf %79, %80 : vector<8x8xf32>
      %82 = vector.broadcast %18 : i32 to vector<8x1xi32>
      %83 = arith.cmpi sgt, %3, %82 : vector<8x1xi32>
      %84 = vector.broadcast %83 : vector<8x1xi1> to vector<8x8xi1>
      %85 = arith.andi %7, %84 : vector<8x8xi1>
      %86 = vector.broadcast %18 : i32 to vector<1x8xi32>
      %87 = arith.cmpi ne, %4, %86 : vector<1x8xi32>
      %88 = vector.broadcast %87 : vector<1x8xi1> to vector<8x8xi1>
      %89 = arith.andi %85, %88 : vector<8x8xi1>
      %c0_50 = arith.constant 0 : index
      %c0_51 = arith.constant 0 : index
      %90 = vector.load %arg4[%c0_50, %c0_51] : memref<8x8xf32, #tpu.memory_space<vmem>>, vector<8x8xf32>
      %cst_52 = arith.constant 0.000000e+00 : f32
      %91 = vector.broadcast %cst_52 : f32 to vector<8x8xf32>
      %92 = arith.select %89, %81, %91 : vector<8x8xi1>, vector<8x8xf32>
      %93 = arith.addf %90, %92 : vector<8x8xf32>
      %c0_53 = arith.constant 0 : index
      %c0_54 = arith.constant 0 : index
      %94 = vector.load %arg4[%c0_53, %c0_54] : memref<8x8xf32, #tpu.memory_space<vmem>>, vector<8x8xf32>
      tpu.vector_store %arg4[%c0_53, %c0_54], %93 {strides = array<i32>} : memref<8x8xf32, #tpu.memory_space<vmem>>, vector<8x8xf32>,
    } else {
    }
    %c2_i32 = arith.constant 2 : i32
    %c1_i32_13 = arith.constant 1 : i32
    %22 = arith.muli %c2_i32, %c1_i32_13 : i32
    %c0_i32_14 = arith.constant 0 : i32
    %23 = arith.addi %c0_i32_14, %22 : i32
    %24 = arith.addi %0, %23 : i32
    %c8_i32_15 = arith.constant 8 : i32
    %25 = arith.cmpi slt, %24, %c8_i32_15 : i32
    %26 = arith.extui %25 : i1 to i32
    %c0_i32_16 = arith.constant 0 : i32
    %27 = arith.cmpi ne, %26, %c0_i32_16 : i32
    scf.if %27 {
      %66 = arith.index_cast %24 : i32 to index
      %c0_45 = arith.constant 0 : index
      %67 = vector.load %arg1[%66, %c0_45] : memref<8x8xf32, #tpu.memory_space<vmem>>, vector<1x8xf32>
      %68 = arith.index_cast %24 : i32 to index
      %c0_46 = arith.constant 0 : index
      %69 = vector.load %arg2[%68, %c0_46] : memref<8x8xf32, #tpu.memory_space<vmem>>, vector<1x8xf32>
      %70 = vector.broadcast %69 : vector<1x8xf32> to vector<8x8xf32>
      %71 = arith.subf %2, %70 : vector<8x8xf32>
      %72 = vector.broadcast %67 : vector<1x8xf32> to vector<8x8xf32>
      %73 = arith.subf %1, %72 : vector<8x8xf32>
      %74 = arith.subf %73, %71 : vector<8x8xf32>
      %cst_47 = arith.constant 0.000000e+00 : f32
      %75 = vector.broadcast %cst_47 : f32 to vector<8x8xf32>
      %76 = arith.cmpf olt, %71, %75 : vector<8x8xf32>
      %cst_48 = arith.constant 0.000000e+00 : f32
      %77 = vector.broadcast %cst_48 : f32 to vector<8x8xf32>
      %78 = arith.subf %77, %74 : vector<8x8xf32>
      %79 = arith.select %76, %74, %78 : vector<8x8xi1>, vector<8x8xf32>
      %cst_49 = arith.constant 0.000000e+00 : f32
      %80 = vector.broadcast %cst_49 : f32 to vector<8x8xf32>
      %81 = arith.maximumf %79, %80 : vector<8x8xf32>
      %82 = vector.broadcast %24 : i32 to vector<8x1xi32>
      %83 = arith.cmpi sgt, %3, %82 : vector<8x1xi32>
      %84 = vector.broadcast %83 : vector<8x1xi1> to vector<8x8xi1>
      %85 = arith.andi %7, %84 : vector<8x8xi1>
      %86 = vector.broadcast %24 : i32 to vector<1x8xi32>
      %87 = arith.cmpi ne, %4, %86 : vector<1x8xi32>
      %88 = vector.broadcast %87 : vector<1x8xi1> to vector<8x8xi1>
      %89 = arith.andi %85, %88 : vector<8x8xi1>
      %c0_50 = arith.constant 0 : index
      %c0_51 = arith.constant 0 : index
      %90 = vector.load %arg4[%c0_50, %c0_51] : memref<8x8xf32, #tpu.memory_space<vmem>>, vector<8x8xf32>
      %cst_52 = arith.constant 0.000000e+00 : f32
      %91 = vector.broadcast %cst_52 : f32 to vector<8x8xf32>
      %92 = arith.select %89, %81, %91 : vector<8x8xi1>, vector<8x8xf32>
      %93 = arith.addf %90, %92 : vector<8x8xf32>
      %c0_53 = arith.constant 0 : index
      %c0_54 = arith.constant 0 : index
      %94 = vector.load %arg4[%c0_53, %c0_54] : memref<8x8xf32, #tpu.memory_space<vmem>>, vector<8x8xf32>
      tpu.vector_store %arg4[%c0_53, %c0_54], %93 {strides = array<i32>} : memref<8x8xf32, #tpu.memory_space<vmem>>, vector<8x8xf32>,
    } else {
    }
    %c3_i32 = arith.constant 3 : i32
    %c1_i32_17 = arith.constant 1 : i32
    %28 = arith.muli %c3_i32, %c1_i32_17 : i32
    %c0_i32_18 = arith.constant 0 : i32
    %29 = arith.addi %c0_i32_18, %28 : i32
    %30 = arith.addi %0, %29 : i32
    %c8_i32_19 = arith.constant 8 : i32
    %31 = arith.cmpi slt, %30, %c8_i32_19 : i32
    %32 = arith.extui %31 : i1 to i32
    %c0_i32_20 = arith.constant 0 : i32
    %33 = arith.cmpi ne, %32, %c0_i32_20 : i32
    scf.if %33 {
      %66 = arith.index_cast %30 : i32 to index
      %c0_45 = arith.constant 0 : index
      %67 = vector.load %arg1[%66, %c0_45] : memref<8x8xf32, #tpu.memory_space<vmem>>, vector<1x8xf32>
      %68 = arith.index_cast %30 : i32 to index
      %c0_46 = arith.constant 0 : index
      %69 = vector.load %arg2[%68, %c0_46] : memref<8x8xf32, #tpu.memory_space<vmem>>, vector<1x8xf32>
      %70 = vector.broadcast %69 : vector<1x8xf32> to vector<8x8xf32>
      %71 = arith.subf %2, %70 : vector<8x8xf32>
      %72 = vector.broadcast %67 : vector<1x8xf32> to vector<8x8xf32>
      %73 = arith.subf %1, %72 : vector<8x8xf32>
      %74 = arith.subf %73, %71 : vector<8x8xf32>
      %cst_47 = arith.constant 0.000000e+00 : f32
      %75 = vector.broadcast %cst_47 : f32 to vector<8x8xf32>
      %76 = arith.cmpf olt, %71, %75 : vector<8x8xf32>
      %cst_48 = arith.constant 0.000000e+00 : f32
      %77 = vector.broadcast %cst_48 : f32 to vector<8x8xf32>
      %78 = arith.subf %77, %74 : vector<8x8xf32>
      %79 = arith.select %76, %74, %78 : vector<8x8xi1>, vector<8x8xf32>
      %cst_49 = arith.constant 0.000000e+00 : f32
      %80 = vector.broadcast %cst_49 : f32 to vector<8x8xf32>
      %81 = arith.maximumf %79, %80 : vector<8x8xf32>
      %82 = vector.broadcast %30 : i32 to vector<8x1xi32>
      %83 = arith.cmpi sgt, %3, %82 : vector<8x1xi32>
      %84 = vector.broadcast %83 : vector<8x1xi1> to vector<8x8xi1>
      %85 = arith.andi %7, %84 : vector<8x8xi1>
      %86 = vector.broadcast %30 : i32 to vector<1x8xi32>
      %87 = arith.cmpi ne, %4, %86 : vector<1x8xi32>
      %88 = vector.broadcast %87 : vector<1x8xi1> to vector<8x8xi1>
      %89 = arith.andi %85, %88 : vector<8x8xi1>
      %c0_50 = arith.constant 0 : index
      %c0_51 = arith.constant 0 : index
      %90 = vector.load %arg4[%c0_50, %c0_51] : memref<8x8xf32, #tpu.memory_space<vmem>>, vector<8x8xf32>
      %cst_52 = arith.constant 0.000000e+00 : f32
      %91 = vector.broadcast %cst_52 : f32 to vector<8x8xf32>
      %92 = arith.select %89, %81, %91 : vector<8x8xi1>, vector<8x8xf32>
      %93 = arith.addf %90, %92 : vector<8x8xf32>
      %c0_53 = arith.constant 0 : index
      %c0_54 = arith.constant 0 : index
      %94 = vector.load %arg4[%c0_53, %c0_54] : memref<8x8xf32, #tpu.memory_space<vmem>>, vector<8x8xf32>
      tpu.vector_store %arg4[%c0_53, %c0_54], %93 {strides = array<i32>} : memref<8x8xf32, #tpu.memory_space<vmem>>, vector<8x8xf32>,
    } else {
    }
    %c4_i32 = arith.constant 4 : i32
    %c1_i32_21 = arith.constant 1 : i32
    %34 = arith.muli %c4_i32, %c1_i32_21 : i32
    %c0_i32_22 = arith.constant 0 : i32
    %35 = arith.addi %c0_i32_22, %34 : i32
    %36 = arith.addi %0, %35 : i32
    %c8_i32_23 = arith.constant 8 : i32
    %37 = arith.cmpi slt, %36, %c8_i32_23 : i32
    %38 = arith.extui %37 : i1 to i32
    %c0_i32_24 = arith.constant 0 : i32
    %39 = arith.cmpi ne, %38, %c0_i32_24 : i32
    scf.if %39 {
      %66 = arith.index_cast %36 : i32 to index
      %c0_45 = arith.constant 0 : index
      %67 = vector.load %arg1[%66, %c0_45] : memref<8x8xf32, #tpu.memory_space<vmem>>, vector<1x8xf32>
      %68 = arith.index_cast %36 : i32 to index
      %c0_46 = arith.constant 0 : index
      %69 = vector.load %arg2[%68, %c0_46] : memref<8x8xf32, #tpu.memory_space<vmem>>, vector<1x8xf32>
      %70 = vector.broadcast %69 : vector<1x8xf32> to vector<8x8xf32>
      %71 = arith.subf %2, %70 : vector<8x8xf32>
      %72 = vector.broadcast %67 : vector<1x8xf32> to vector<8x8xf32>
      %73 = arith.subf %1, %72 : vector<8x8xf32>
      %74 = arith.subf %73, %71 : vector<8x8xf32>
      %cst_47 = arith.constant 0.000000e+00 : f32
      %75 = vector.broadcast %cst_47 : f32 to vector<8x8xf32>
      %76 = arith.cmpf olt, %71, %75 : vector<8x8xf32>
      %cst_48 = arith.constant 0.000000e+00 : f32
      %77 = vector.broadcast %cst_48 : f32 to vector<8x8xf32>
      %78 = arith.subf %77, %74 : vector<8x8xf32>
      %79 = arith.select %76, %74, %78 : vector<8x8xi1>, vector<8x8xf32>
      %cst_49 = arith.constant 0.000000e+00 : f32
      %80 = vector.broadcast %cst_49 : f32 to vector<8x8xf32>
      %81 = arith.maximumf %79, %80 : vector<8x8xf32>
      %82 = vector.broadcast %36 : i32 to vector<8x1xi32>
      %83 = arith.cmpi sgt, %3, %82 : vector<8x1xi32>
      %84 = vector.broadcast %83 : vector<8x1xi1> to vector<8x8xi1>
      %85 = arith.andi %7, %84 : vector<8x8xi1>
      %86 = vector.broadcast %36 : i32 to vector<1x8xi32>
      %87 = arith.cmpi ne, %4, %86 : vector<1x8xi32>
      %88 = vector.broadcast %87 : vector<1x8xi1> to vector<8x8xi1>
      %89 = arith.andi %85, %88 : vector<8x8xi1>
      %c0_50 = arith.constant 0 : index
      %c0_51 = arith.constant 0 : index
      %90 = vector.load %arg4[%c0_50, %c0_51] : memref<8x8xf32, #tpu.memory_space<vmem>>, vector<8x8xf32>
      %cst_52 = arith.constant 0.000000e+00 : f32
      %91 = vector.broadcast %cst_52 : f32 to vector<8x8xf32>
      %92 = arith.select %89, %81, %91 : vector<8x8xi1>, vector<8x8xf32>
      %93 = arith.addf %90, %92 : vector<8x8xf32>
      %c0_53 = arith.constant 0 : index
      %c0_54 = arith.constant 0 : index
      %94 = vector.load %arg4[%c0_53, %c0_54] : memref<8x8xf32, #tpu.memory_space<vmem>>, vector<8x8xf32>
      tpu.vector_store %arg4[%c0_53, %c0_54], %93 {strides = array<i32>} : memref<8x8xf32, #tpu.memory_space<vmem>>, vector<8x8xf32>,
    } else {
    }
    %c5_i32 = arith.constant 5 : i32
    %c1_i32_25 = arith.constant 1 : i32
    %40 = arith.muli %c5_i32, %c1_i32_25 : i32
    %c0_i32_26 = arith.constant 0 : i32
    %41 = arith.addi %c0_i32_26, %40 : i32
    %42 = arith.addi %0, %41 : i32
    %c8_i32_27 = arith.constant 8 : i32
    %43 = arith.cmpi slt, %42, %c8_i32_27 : i32
    %44 = arith.extui %43 : i1 to i32
    %c0_i32_28 = arith.constant 0 : i32
    %45 = arith.cmpi ne, %44, %c0_i32_28 : i32
    scf.if %45 {
      %66 = arith.index_cast %42 : i32 to index
      %c0_45 = arith.constant 0 : index
      %67 = vector.load %arg1[%66, %c0_45] : memref<8x8xf32, #tpu.memory_space<vmem>>, vector<1x8xf32>
      %68 = arith.index_cast %42 : i32 to index
      %c0_46 = arith.constant 0 : index
      %69 = vector.load %arg2[%68, %c0_46] : memref<8x8xf32, #tpu.memory_space<vmem>>, vector<1x8xf32>
      %70 = vector.broadcast %69 : vector<1x8xf32> to vector<8x8xf32>
      %71 = arith.subf %2, %70 : vector<8x8xf32>
      %72 = vector.broadcast %67 : vector<1x8xf32> to vector<8x8xf32>
      %73 = arith.subf %1, %72 : vector<8x8xf32>
      %74 = arith.subf %73, %71 : vector<8x8xf32>
      %cst_47 = arith.constant 0.000000e+00 : f32
      %75 = vector.broadcast %cst_47 : f32 to vector<8x8xf32>
      %76 = arith.cmpf olt, %71, %75 : vector<8x8xf32>
      %cst_48 = arith.constant 0.000000e+00 : f32
      %77 = vector.broadcast %cst_48 : f32 to vector<8x8xf32>
      %78 = arith.subf %77, %74 : vector<8x8xf32>
      %79 = arith.select %76, %74, %78 : vector<8x8xi1>, vector<8x8xf32>
      %cst_49 = arith.constant 0.000000e+00 : f32
      %80 = vector.broadcast %cst_49 : f32 to vector<8x8xf32>
      %81 = arith.maximumf %79, %80 : vector<8x8xf32>
      %82 = vector.broadcast %42 : i32 to vector<8x1xi32>
      %83 = arith.cmpi sgt, %3, %82 : vector<8x1xi32>
      %84 = vector.broadcast %83 : vector<8x1xi1> to vector<8x8xi1>
      %85 = arith.andi %7, %84 : vector<8x8xi1>
      %86 = vector.broadcast %42 : i32 to vector<1x8xi32>
      %87 = arith.cmpi ne, %4, %86 : vector<1x8xi32>
      %88 = vector.broadcast %87 : vector<1x8xi1> to vector<8x8xi1>
      %89 = arith.andi %85, %88 : vector<8x8xi1>
      %c0_50 = arith.constant 0 : index
      %c0_51 = arith.constant 0 : index
      %90 = vector.load %arg4[%c0_50, %c0_51] : memref<8x8xf32, #tpu.memory_space<vmem>>, vector<8x8xf32>
      %cst_52 = arith.constant 0.000000e+00 : f32
      %91 = vector.broadcast %cst_52 : f32 to vector<8x8xf32>
      %92 = arith.select %89, %81, %91 : vector<8x8xi1>, vector<8x8xf32>
      %93 = arith.addf %90, %92 : vector<8x8xf32>
      %c0_53 = arith.constant 0 : index
      %c0_54 = arith.constant 0 : index
      %94 = vector.load %arg4[%c0_53, %c0_54] : memref<8x8xf32, #tpu.memory_space<vmem>>, vector<8x8xf32>
      tpu.vector_store %arg4[%c0_53, %c0_54], %93 {strides = array<i32>} : memref<8x8xf32, #tpu.memory_space<vmem>>, vector<8x8xf32>,
    } else {
    }
    %c6_i32 = arith.constant 6 : i32
    %c1_i32_29 = arith.constant 1 : i32
    %46 = arith.muli %c6_i32, %c1_i32_29 : i32
    %c0_i32_30 = arith.constant 0 : i32
    %47 = arith.addi %c0_i32_30, %46 : i32
    %48 = arith.addi %0, %47 : i32
    %c8_i32_31 = arith.constant 8 : i32
    %49 = arith.cmpi slt, %48, %c8_i32_31 : i32
    %50 = arith.extui %49 : i1 to i32
    %c0_i32_32 = arith.constant 0 : i32
    %51 = arith.cmpi ne, %50, %c0_i32_32 : i32
    scf.if %51 {
      %66 = arith.index_cast %48 : i32 to index
      %c0_45 = arith.constant 0 : index
      %67 = vector.load %arg1[%66, %c0_45] : memref<8x8xf32, #tpu.memory_space<vmem>>, vector<1x8xf32>
      %68 = arith.index_cast %48 : i32 to index
      %c0_46 = arith.constant 0 : index
      %69 = vector.load %arg2[%68, %c0_46] : memref<8x8xf32, #tpu.memory_space<vmem>>, vector<1x8xf32>
      %70 = vector.broadcast %69 : vector<1x8xf32> to vector<8x8xf32>
      %71 = arith.subf %2, %70 : vector<8x8xf32>
      %72 = vector.broadcast %67 : vector<1x8xf32> to vector<8x8xf32>
      %73 = arith.subf %1, %72 : vector<8x8xf32>
      %74 = arith.subf %73, %71 : vector<8x8xf32>
      %cst_47 = arith.constant 0.000000e+00 : f32
      %75 = vector.broadcast %cst_47 : f32 to vector<8x8xf32>
      %76 = arith.cmpf olt, %71, %75 : vector<8x8xf32>
      %cst_48 = arith.constant 0.000000e+00 : f32
      %77 = vector.broadcast %cst_48 : f32 to vector<8x8xf32>
      %78 = arith.subf %77, %74 : vector<8x8xf32>
      %79 = arith.select %76, %74, %78 : vector<8x8xi1>, vector<8x8xf32>
      %cst_49 = arith.constant 0.000000e+00 : f32
      %80 = vector.broadcast %cst_49 : f32 to vector<8x8xf32>
      %81 = arith.maximumf %79, %80 : vector<8x8xf32>
      %82 = vector.broadcast %48 : i32 to vector<8x1xi32>
      %83 = arith.cmpi sgt, %3, %82 : vector<8x1xi32>
      %84 = vector.broadcast %83 : vector<8x1xi1> to vector<8x8xi1>
      %85 = arith.andi %7, %84 : vector<8x8xi1>
      %86 = vector.broadcast %48 : i32 to vector<1x8xi32>
      %87 = arith.cmpi ne, %4, %86 : vector<1x8xi32>
      %88 = vector.broadcast %87 : vector<1x8xi1> to vector<8x8xi1>
      %89 = arith.andi %85, %88 : vector<8x8xi1>
      %c0_50 = arith.constant 0 : index
      %c0_51 = arith.constant 0 : index
      %90 = vector.load %arg4[%c0_50, %c0_51] : memref<8x8xf32, #tpu.memory_space<vmem>>, vector<8x8xf32>
      %cst_52 = arith.constant 0.000000e+00 : f32
      %91 = vector.broadcast %cst_52 : f32 to vector<8x8xf32>
      %92 = arith.select %89, %81, %91 : vector<8x8xi1>, vector<8x8xf32>
      %93 = arith.addf %90, %92 : vector<8x8xf32>
      %c0_53 = arith.constant 0 : index
      %c0_54 = arith.constant 0 : index
      %94 = vector.load %arg4[%c0_53, %c0_54] : memref<8x8xf32, #tpu.memory_space<vmem>>, vector<8x8xf32>
      tpu.vector_store %arg4[%c0_53, %c0_54], %93 {strides = array<i32>} : memref<8x8xf32, #tpu.memory_space<vmem>>, vector<8x8xf32>,
    } else {
    }
    %c7_i32 = arith.constant 7 : i32
    %c1_i32_33 = arith.constant 1 : i32
    %52 = arith.muli %c7_i32, %c1_i32_33 : i32
    %c0_i32_34 = arith.constant 0 : i32
    %53 = arith.addi %c0_i32_34, %52 : i32
    %54 = arith.addi %0, %53 : i32
    %c8_i32_35 = arith.constant 8 : i32
    %55 = arith.cmpi slt, %54, %c8_i32_35 : i32
    %56 = arith.extui %55 : i1 to i32
    %c0_i32_36 = arith.constant 0 : i32
    %57 = arith.cmpi ne, %56, %c0_i32_36 : i32
    scf.if %57 {
      %66 = arith.index_cast %54 : i32 to index
      %c0_45 = arith.constant 0 : index
      %67 = vector.load %arg1[%66, %c0_45] : memref<8x8xf32, #tpu.memory_space<vmem>>, vector<1x8xf32>
      %68 = arith.index_cast %54 : i32 to index
      %c0_46 = arith.constant 0 : index
      %69 = vector.load %arg2[%68, %c0_46] : memref<8x8xf32, #tpu.memory_space<vmem>>, vector<1x8xf32>
      %70 = vector.broadcast %69 : vector<1x8xf32> to vector<8x8xf32>
      %71 = arith.subf %2, %70 : vector<8x8xf32>
      %72 = vector.broadcast %67 : vector<1x8xf32> to vector<8x8xf32>
      %73 = arith.subf %1, %72 : vector<8x8xf32>
      %74 = arith.subf %73, %71 : vector<8x8xf32>
      %cst_47 = arith.constant 0.000000e+00 : f32
      %75 = vector.broadcast %cst_47 : f32 to vector<8x8xf32>
      %76 = arith.cmpf olt, %71, %75 : vector<8x8xf32>
      %cst_48 = arith.constant 0.000000e+00 : f32
      %77 = vector.broadcast %cst_48 : f32 to vector<8x8xf32>
      %78 = arith.subf %77, %74 : vector<8x8xf32>
      %79 = arith.select %76, %74, %78 : vector<8x8xi1>, vector<8x8xf32>
      %cst_49 = arith.constant 0.000000e+00 : f32
      %80 = vector.broadcast %cst_49 : f32 to vector<8x8xf32>
      %81 = arith.maximumf %79, %80 : vector<8x8xf32>
      %82 = vector.broadcast %54 : i32 to vector<8x1xi32>
      %83 = arith.cmpi sgt, %3, %82 : vector<8x1xi32>
      %84 = vector.broadcast %83 : vector<8x1xi1> to vector<8x8xi1>
      %85 = arith.andi %7, %84 : vector<8x8xi1>
      %86 = vector.broadcast %54 : i32 to vector<1x8xi32>
      %87 = arith.cmpi ne, %4, %86 : vector<1x8xi32>
      %88 = vector.broadcast %87 : vector<1x8xi1> to vector<8x8xi1>
      %89 = arith.andi %85, %88 : vector<8x8xi1>
      %c0_50 = arith.constant 0 : index
      %c0_51 = arith.constant 0 : index
      %90 = vector.load %arg4[%c0_50, %c0_51] : memref<8x8xf32, #tpu.memory_space<vmem>>, vector<8x8xf32>
      %cst_52 = arith.constant 0.000000e+00 : f32
      %91 = vector.broadcast %cst_52 : f32 to vector<8x8xf32>
      %92 = arith.select %89, %81, %91 : vector<8x8xi1>, vector<8x8xf32>
      %93 = arith.addf %90, %92 : vector<8x8xf32>
      %c0_53 = arith.constant 0 : index
      %c0_54 = arith.constant 0 : index
      %94 = vector.load %arg4[%c0_53, %c0_54] : memref<8x8xf32, #tpu.memory_space<vmem>>, vector<8x8xf32>
      tpu.vector_store %arg4[%c0_53, %c0_54], %93 {strides = array<i32>} : memref<8x8xf32, #tpu.memory_space<vmem>>, vector<8x8xf32>,
    } else {
    }
    %c8_i32_37 = arith.constant 8 : i32
    %c0_38 = arith.constant 0 : index
    %c0_39 = arith.constant 0 : index
    %58 = vector.load %arg4[%c0_38, %c0_39] : memref<8x8xf32, #tpu.memory_space<vmem>>, vector<8x8xf32>
    %cst_40 = arith.constant dense<0.000000e+00> : vector<8xf32>
    %59 = vector.multi_reduction <add>, %58, %cst_40 [1] : vector<8x8xf32> to vector<8xf32>
    %60 = vector.shape_cast %59 : vector<8xf32> to vector<8x1xf32>
    %cst_41 = arith.constant dense<0.000000e+00> : vector<1xf32>
    %61 = vector.multi_reduction <add>, %60, %cst_41 [0] : vector<8x1xf32> to vector<1xf32>
    %62 = vector.shape_cast %61 : vector<1xf32> to vector<1x1xf32>
    %63 = vector.shape_cast %62 : vector<1x1xf32> to vector<1x1x1xf32>
    %64 = vector.broadcast %63 : vector<1x1x1xf32> to vector<1x8x128xf32>
    %c0_42 = arith.constant 0 : index
    %c0_43 = arith.constant 0 : index
    %c0_44 = arith.constant 0 : index
    %65 = vector.load %arg3[%c0_42, %c0_43, %c0_44] : memref<1x8x128xf32, #tpu.memory_space<vmem>>, vector<1x8x128xf32>
    tpu.vector_store %arg3[%c0_42, %c0_43, %c0_44], %64 {strides = array<i32>} : memref<1x8x128xf32, #tpu.memory_space<vmem>>, vector<1x8x128xf32>,
    return
  }
  func.func @transform_0(%arg0: i32) -> (i32, i32) {
    %c0_i32 = arith.constant 0 : i32
    %c0_i32_0 = arith.constant 0 : i32
    %c0_i32_1 = arith.constant 0 : i32
    return %c0_i32, %c0_i32_0 : i32, i32
  }
  func.func @transform_1(%arg0: i32) -> (i32, i32) {
    %c0_i32 = arith.constant 0 : i32
    %c0_i32_0 = arith.constant 0 : i32
    %c0_i32_1 = arith.constant 0 : i32
    return %c0_i32, %c0_i32_0 : i32, i32
  }
  func.func @transform_2(%arg0: i32) -> (i32, i32, i32) {
    %c0_i32 = arith.constant 0 : i32
    %c0_i32_0 = arith.constant 0 : i32
    %c0_i32_1 = arith.constant 0 : i32
    return %arg0, %c0_i32, %c0_i32_0 : i32, i32, i32
  }
}

</mosaic_0001>

<llo_original>
// kernel: tpu_custom_call.1
$region0: #{tpu_custom_call.1}
  #allocation0 [shape = 'u32[]', space=smem, size = 0x4, offset = 0x4, fixed_abs, tag = 'smem constant byte address 0x4 - core index']
  #allocation1 [shape = 'u32[144,128]{1,0:T(1,128)}', space=vmem, size = 0x12000, scoped, tag = 'internal scratch']
  #allocation2 [shape = 'f32[8,8]{1,0:T(8,128)}', space=vmem, size = 0x1000, scoped, tag = 'scratch operand']
  %s0 = inlined_call_operand.hbm [shape: f32[8,8], index: 0, kind: input, shape index: {}]
  %s1 = inlined_call_operand.hbm [shape: f32[8,8], index: 1, kind: input, shape index: {}]
  %s2 = inlined_call_operand.hbm [shape: f32[1,8,128], index: 2, kind: output, shape index: {}]
  %s3 = sld [smem:[#allocation0]]
  $region58: #{tpu_custom_call.1} parent=0
    _
  %s5 = ssub.s32 1, %s3
  %s6 = scalar_select 0, %s5, %s3
  $region1: #{tpu_custom_call.1} parent=0
    #allocation3 [shape = 'u8[4096]{0}', space=vmem, size = 0x1000, scoped, tag = 'input window, operand 0, single buffered']
    #allocation4 [shape = 's32[1]{0}', space=sflag, size = 0x4, scoped, tag = 'scoped memory for tpu_custom_call.1']
    #allocation5 [shape = 's32[1]{0}', space=sflag, size = 0x4, scoped, tag = 'scoped memory for tpu_custom_call.1']
    #allocation6 [shape = 'u8[4096]{0}', space=vmem, size = 0x1000, scoped, tag = 'input window, operand 1, single buffered']
    #allocation7 [shape = 's32[1]{0}', space=sflag, size = 0x4, scoped, tag = 'scoped memory for tpu_custom_call.1']
    #allocation8 [shape = 'u8[4096]{0}', space=vmem, size = 0x1000, scoped, tag = 'output window, operand 0, single buffered']
    %7 = vsyncpa [#allocation4], 0
    %8 = vsyncpa [#allocation7], 0
    %9 = vsyncpa [#allocation5], 0
    // Predicated region
    $region2: #{tpu_custom_call.1} parent=1 // pred_check
      _
    $region3: #{tpu_custom_call.1} parent=1 // pred_check_branch
      %11 = sbr.rel (0) target = $region5
    $region4: #{tpu_custom_call.1} parent=1 // pred_region
      %s13 = ssub.s32 128, 128
      %14 = vsyncadd [#allocation4], %s13
      %s16 = sshll.u32 [#allocation3], 4
      %s17 = int_to_ptr.vmem [resolvable:$true] %s16
      %19 = dma.hbm_to_vmem [thread:$0]  %s0, 128, %s17, [#allocation4]
    $region5: #{tpu_custom_call.1} parent=1 // pred_fallthru
      _
    // Predicated region
    $region6: #{tpu_custom_call.1} parent=1 // pred_check
      _
    $region7: #{tpu_custom_call.1} parent=1 // pred_check_branch
      %21 = sbr.rel (0) target = $region9
    $region8: #{tpu_custom_call.1} parent=1 // pred_region
      %s23 = ssub.s32 128, 128
      %24 = vsyncadd [#allocation7], %s23
      %s26 = sshll.u32 [#allocation6], 4
      %s27 = int_to_ptr.vmem [resolvable:$true] %s26
      %29 = dma.hbm_to_vmem [thread:$0]  %s1, 128, %s27, [#allocation7]
    $region9: #{tpu_custom_call.1} parent=1 // pred_fallthru
      _
    // Predicated region
    $region10: #{tpu_custom_call.1} parent=1 // pred_check
      _
    $region11: #{tpu_custom_call.1} parent=1 // pred_check_branch
      %31 = sbr.rel (0) target = $region13
    $region12: #{tpu_custom_call.1} parent=1 // pred_region
      %32 = dma.done [#allocation4], 128
    $region13: #{tpu_custom_call.1} parent=1 // pred_fallthru
      _
    // Predicated region
    $region14: #{tpu_custom_call.1} parent=1 // pred_check
      _
    $region15: #{tpu_custom_call.1} parent=1 // pred_check_branch
      %34 = sbr.rel (0) target = $region17
    $region16: #{tpu_custom_call.1} parent=1 // pred_region
      %35 = dma.done [#allocation7], 128
    $region17: #{tpu_custom_call.1} parent=1 // pred_fallthru
      _
    %s36 = smul.u32 0, 8
    %v37 = vld [vmem:[#allocation3] sm:$0xff]
    %v38 = vld [vmem:[#allocation6] sm:$0xff]
    %v39 = vlaneseq
    %v40 = vshrl.u32 %v39, 7
    %v41 = vlaneseq
    %v42 = vand.u32 %v41, 127
    %vm43 = vcmp.ne.s32.totalorder %v40, %v42
    %vm44 = vcmask 64512
    %45 = vst.msk [vmem:[#allocation2] sm:$0xff] %vm44, 0.0
    %p46 = scmp.lt.s32.totalorder %s36, 8
    // Predicated region
    $region18: #{tpu_custom_call.1} parent=1 // pred_check
      %p47 = pneg %p46
    $region19: #{tpu_custom_call.1} parent=1 // pred_check_branch
      %49 = sbr.rel (%p47) target = $region21
    $region20: #{tpu_custom_call.1} parent=1 // pred_region
      %s50 = scalar_lea.vmem [#allocation3], %s36
      %v51 = vld [vmem:[%s50] sm:$0x1]
      %s52 = scalar_lea.vmem [#allocation6], %s36
      %v53 = vld [vmem:[%s52] sm:$0x1]
      %v54 = vlaneseq
      %v55 = vshrl.u32 %v54, 7
      %v56 = vsub.s32 0, %v55
      %v57 = vrot.slane %v53, %v56
      %v58 = vsub.f32 %v38, %v57
      %v59 = vlaneseq
      %v60 = vshrl.u32 %v59, 7
      %v61 = vsub.s32 0, %v60
      %v62 = vrot.slane %v51, %v61
      %v63 = vsub.f32 %v37, %v62
      %v64 = vsub.f32 %v63, %v58
      %vm65 = vcmp.lt.f32.partialorder %v58, 0.0
      %v66 = vsub.f32 0.0, %v64
      %v67 = vsel %vm65, %v64, %v66
      %v68 = vmax.f32 %v67, 0.0
      %v69 = vstv %s36
      %vm70 = vcmp.gt.s32.totalorder %v40, %v69
      %v71 = vsel %vm70, 1, 0
      %vm72 = vcmp.eq.s32.totalorder %v71, 1
      %vm73 = vmand %vm43, %vm72
      %vm74 = vcmp.ne.s32.totalorder %v42, %v69
      %v75 = vsel %vm74, 1, 0
      %vm76 = vcmp.eq.s32.totalorder %v75, 1
      %vm77 = vmand %vm73, %vm76
      %v78 = vld [vmem:[#allocation2] sm:$0xff]
      %v79 = vsel %vm77, %v68, 0.0
      %v80 = vadd.f32 %v78, %v79
      %81 = vst.msk [vmem:[#allocation2] sm:$0xff] %vm44, %v80
    $region21: #{tpu_custom_call.1} parent=1 // pred_fallthru
      _
    %s82 = sadd.s32 %s36, 1
    %p83 = scmp.lt.s32.totalorder %s82, 8
    // Predicated region
    $region22: #{tpu_custom_call.1} parent=1 // pred_check
      %p84 = pneg %p83
    $region23: #{tpu_custom_call.1} parent=1 // pred_check_branch
      %86 = sbr.rel (%p84) target = $region25
    $region24: #{tpu_custom_call.1} parent=1 // pred_region
      %s87 = scalar_lea.vmem [#allocation3], %s82
      %v88 = vld [vmem:[%s87] sm:$0x1]
      %s89 = scalar_lea.vmem [#allocation6], %s82
      %v90 = vld [vmem:[%s89] sm:$0x1]
      %v91 = vlaneseq
      %v92 = vshrl.u32 %v91, 7
      %v93 = vsub.s32 0, %v92
      %v94 = vrot.slane %v90, %v93
      %v95 = vsub.f32 %v38, %v94
      %v96 = vlaneseq
      %v97 = vshrl.u32 %v96, 7
      %v98 = vsub.s32 0, %v97
      %v99 = vrot.slane %v88, %v98
      %v100 = vsub.f32 %v37, %v99
      %v101 = vsub.f32 %v100, %v95
      %vm102 = vcmp.lt.f32.partialorder %v95, 0.0
      %v103 = vsub.f32 0.0, %v101
      %v104 = vsel %vm102, %v101, %v103
      %v105 = vmax.f32 %v104, 0.0
      %v106 = vstv %s82
      %vm107 = vcmp.gt.s32.totalorder %v40, %v106
      %v108 = vsel %vm107, 1, 0
      %vm109 = vcmp.eq.s32.totalorder %v108, 1
      %vm110 = vmand %vm43, %vm109
      %vm111 = vcmp.ne.s32.totalorder %v42, %v106
      %v112 = vsel %vm111, 1, 0
      %vm113 = vcmp.eq.s32.totalorder %v112, 1
      %vm114 = vmand %vm110, %vm113
      %v115 = vld [vmem:[#allocation2] sm:$0xff]
      %v116 = vsel %vm114, %v105, 0.0
      %v117 = vadd.f32 %v115, %v116
      %118 = vst.msk [vmem:[#allocation2] sm:$0xff] %vm44, %v117
    $region25: #{tpu_custom_call.1} parent=1 // pred_fallthru
      _
    %s119 = sadd.s32 %s36, 2
    %p120 = scmp.lt.s32.totalorder %s119, 8
    // Predicated region
    $region26: #{tpu_custom_call.1} parent=1 // pred_check
      %p121 = pneg %p120
    $region27: #{tpu_custom_call.1} parent=1 // pred_check_branch
      %123 = sbr.rel (%p121) target = $region29
    $region28: #{tpu_custom_call.1} parent=1 // pred_region
      %s124 = scalar_lea.vmem [#allocation3], %s119
      %v125 = vld [vmem:[%s124] sm:$0x1]
      %s126 = scalar_lea.vmem [#allocation6], %s119
      %v127 = vld [vmem:[%s126] sm:$0x1]
      %v128 = vlaneseq
      %v129 = vshrl.u32 %v128, 7
      %v130 = vsub.s32 0, %v129
      %v131 = vrot.slane %v127, %v130
      %v132 = vsub.f32 %v38, %v131
      %v133 = vlaneseq
      %v134 = vshrl.u32 %v133, 7
      %v135 = vsub.s32 0, %v134
      %v136 = vrot.slane %v125, %v135
      %v137 = vsub.f32 %v37, %v136
      %v138 = vsub.f32 %v137, %v132
      %vm139 = vcmp.lt.f32.partialorder %v132, 0.0
      %v140 = vsub.f32 0.0, %v138
      %v141 = vsel %vm139, %v138, %v140
      %v142 = vmax.f32 %v141, 0.0
      %v143 = vstv %s119
      %vm144 = vcmp.gt.s32.totalorder %v40, %v143
      %v145 = vsel %vm144, 1, 0
      %vm146 = vcmp.eq.s32.totalorder %v145, 1
      %vm147 = vmand %vm43, %vm146
      %vm148 = vcmp.ne.s32.totalorder %v42, %v143
      %v149 = vsel %vm148, 1, 0
      %vm150 = vcmp.eq.s32.totalorder %v149, 1
      %vm151 = vmand %vm147, %vm150
      %v152 = vld [vmem:[#allocation2] sm:$0xff]
      %v153 = vsel %vm151, %v142, 0.0
      %v154 = vadd.f32 %v152, %v153
      %155 = vst.msk [vmem:[#allocation2] sm:$0xff] %vm44, %v154
    $region29: #{tpu_custom_call.1} parent=1 // pred_fallthru
      _
    %s156 = sadd.s32 %s36, 3
    %p157 = scmp.lt.s32.totalorder %s156, 8
    // Predicated region
    $region30: #{tpu_custom_call.1} parent=1 // pred_check
      %p158 = pneg %p157
    $region31: #{tpu_custom_call.1} parent=1 // pred_check_branch
      %160 = sbr.rel (%p158) target = $region33
    $region32: #{tpu_custom_call.1} parent=1 // pred_region
      %s161 = scalar_lea.vmem [#allocation3], %s156
      %v162 = vld [vmem:[%s161] sm:$0x1]
      %s163 = scalar_lea.vmem [#allocation6], %s156
      %v164 = vld [vmem:[%s163] sm:$0x1]
      %v165 = vlaneseq
      %v166 = vshrl.u32 %v165, 7
      %v167 = vsub.s32 0, %v166
      %v168 = vrot.slane %v164, %v167
      %v169 = vsub.f32 %v38, %v168
      %v170 = vlaneseq
      %v171 = vshrl.u32 %v170, 7
      %v172 = vsub.s32 0, %v171
      %v173 = vrot.slane %v162, %v172
      %v174 = vsub.f32 %v37, %v173
      %v175 = vsub.f32 %v174, %v169
      %vm176 = vcmp.lt.f32.partialorder %v169, 0.0
      %v177 = vsub.f32 0.0, %v175
      %v178 = vsel %vm176, %v175, %v177
      %v179 = vmax.f32 %v178, 0.0
      %v180 = vstv %s156
      %vm181 = vcmp.gt.s32.totalorder %v40, %v180
      %v182 = vsel %vm181, 1, 0
      %vm183 = vcmp.eq.s32.totalorder %v182, 1
      %vm184 = vmand %vm43, %vm183
      %vm185 = vcmp.ne.s32.totalorder %v42, %v180
      %v186 = vsel %vm185, 1, 0
      %vm187 = vcmp.eq.s32.totalorder %v186, 1
      %vm188 = vmand %vm184, %vm187
      %v189 = vld [vmem:[#allocation2] sm:$0xff]
      %v190 = vsel %vm188, %v179, 0.0
      %v191 = vadd.f32 %v189, %v190
      %192 = vst.msk [vmem:[#allocation2] sm:$0xff] %vm44, %v191
    $region33: #{tpu_custom_call.1} parent=1 // pred_fallthru
      _
    %s193 = sadd.s32 %s36, 4
    %p194 = scmp.lt.s32.totalorder %s193, 8
    // Predicated region
    $region34: #{tpu_custom_call.1} parent=1 // pred_check
      %p195 = pneg %p194
    $region35: #{tpu_custom_call.1} parent=1 // pred_check_branch
      %197 = sbr.rel (%p195) target = $region37
    $region36: #{tpu_custom_call.1} parent=1 // pred_region
      %s198 = scalar_lea.vmem [#allocation3], %s193
      %v199 = vld [vmem:[%s198] sm:$0x1]
      %s200 = scalar_lea.vmem [#allocation6], %s193
      %v201 = vld [vmem:[%s200] sm:$0x1]
      %v202 = vlaneseq
      %v203 = vshrl.u32 %v202, 7
      %v204 = vsub.s32 0, %v203
      %v205 = vrot.slane %v201, %v204
      %v206 = vsub.f32 %v38, %v205
      %v207 = vlaneseq
      %v208 = vshrl.u32 %v207, 7
      %v209 = vsub.s32 0, %v208
      %v210 = vrot.slane %v199, %v209
      %v211 = vsub.f32 %v37, %v210
      %v212 = vsub.f32 %v211, %v206
      %vm213 = vcmp.lt.f32.partialorder %v206, 0.0
      %v214 = vsub.f32 0.0, %v212
      %v215 = vsel %vm213, %v212, %v214
      %v216 = vmax.f32 %v215, 0.0
      %v217 = vstv %s193
      %vm218 = vcmp.gt.s32.totalorder %v40, %v217
      %v219 = vsel %vm218, 1, 0
      %vm220 = vcmp.eq.s32.totalorder %v219, 1
      %vm221 = vmand %vm43, %vm220
      %vm222 = vcmp.ne.s32.totalorder %v42, %v217
      %v223 = vsel %vm222, 1, 0
      %vm224 = vcmp.eq.s32.totalorder %v223, 1
      %vm225 = vmand %vm221, %vm224
      %v226 = vld [vmem:[#allocation2] sm:$0xff]
      %v227 = vsel %vm225, %v216, 0.0
      %v228 = vadd.f32 %v226, %v227
      %229 = vst.msk [vmem:[#allocation2] sm:$0xff] %vm44, %v228
    $region37: #{tpu_custom_call.1} parent=1 // pred_fallthru
      _
    %s230 = sadd.s32 %s36, 5
    %p231 = scmp.lt.s32.totalorder %s230, 8
    // Predicated region
    $region38: #{tpu_custom_call.1} parent=1 // pred_check
      %p232 = pneg %p231
    $region39: #{tpu_custom_call.1} parent=1 // pred_check_branch
      %234 = sbr.rel (%p232) target = $region41
    $region40: #{tpu_custom_call.1} parent=1 // pred_region
      %s235 = scalar_lea.vmem [#allocation3], %s230
      %v236 = vld [vmem:[%s235] sm:$0x1]
      %s237 = scalar_lea.vmem [#allocation6], %s230
      %v238 = vld [vmem:[%s237] sm:$0x1]
      %v239 = vlaneseq
      %v240 = vshrl.u32 %v239, 7
      %v241 = vsub.s32 0, %v240
      %v242 = vrot.slane %v238, %v241
      %v243 = vsub.f32 %v38, %v242
      %v244 = vlaneseq
      %v245 = vshrl.u32 %v244, 7
      %v246 = vsub.s32 0, %v245
      %v247 = vrot.slane %v236, %v246
      %v248 = vsub.f32 %v37, %v247
      %v249 = vsub.f32 %v248, %v243
      %vm250 = vcmp.lt.f32.partialorder %v243, 0.0
      %v251 = vsub.f32 0.0, %v249
      %v252 = vsel %vm250, %v249, %v251
      %v253 = vmax.f32 %v252, 0.0
      %v254 = vstv %s230
      %vm255 = vcmp.gt.s32.totalorder %v40, %v254
      %v256 = vsel %vm255, 1, 0
      %vm257 = vcmp.eq.s32.totalorder %v256, 1
      %vm258 = vmand %vm43, %vm257
      %vm259 = vcmp.ne.s32.totalorder %v42, %v254
      %v260 = vsel %vm259, 1, 0
      %vm261 = vcmp.eq.s32.totalorder %v260, 1
      %vm262 = vmand %vm258, %vm261
      %v263 = vld [vmem:[#allocation2] sm:$0xff]
      %v264 = vsel %vm262, %v253, 0.0
      %v265 = vadd.f32 %v263, %v264
      %266 = vst.msk [vmem:[#allocation2] sm:$0xff] %vm44, %v265
    $region41: #{tpu_custom_call.1} parent=1 // pred_fallthru
      _
    %s267 = sadd.s32 %s36, 6
    %p268 = scmp.lt.s32.totalorder %s267, 8
    // Predicated region
    $region42: #{tpu_custom_call.1} parent=1 // pred_check
      %p269 = pneg %p268
    $region43: #{tpu_custom_call.1} parent=1 // pred_check_branch
      %271 = sbr.rel (%p269) target = $region45
    $region44: #{tpu_custom_call.1} parent=1 // pred_region
      %s272 = scalar_lea.vmem [#allocation3], %s267
      %v273 = vld [vmem:[%s272] sm:$0x1]
      %s274 = scalar_lea.vmem [#allocation6], %s267
      %v275 = vld [vmem:[%s274] sm:$0x1]
      %v276 = vlaneseq
      %v277 = vshrl.u32 %v276, 7
      %v278 = vsub.s32 0, %v277
      %v279 = vrot.slane %v275, %v278
      %v280 = vsub.f32 %v38, %v279
      %v281 = vlaneseq
      %v282 = vshrl.u32 %v281, 7
      %v283 = vsub.s32 0, %v282
      %v284 = vrot.slane %v273, %v283
      %v285 = vsub.f32 %v37, %v284
      %v286 = vsub.f32 %v285, %v280
      %vm287 = vcmp.lt.f32.partialorder %v280, 0.0
      %v288 = vsub.f32 0.0, %v286
      %v289 = vsel %vm287, %v286, %v288
      %v290 = vmax.f32 %v289, 0.0
      %v291 = vstv %s267
      %vm292 = vcmp.gt.s32.totalorder %v40, %v291
      %v293 = vsel %vm292, 1, 0
      %vm294 = vcmp.eq.s32.totalorder %v293, 1
      %vm295 = vmand %vm43, %vm294
      %vm296 = vcmp.ne.s32.totalorder %v42, %v291
      %v297 = vsel %vm296, 1, 0
      %vm298 = vcmp.eq.s32.totalorder %v297, 1
      %vm299 = vmand %vm295, %vm298
      %v300 = vld [vmem:[#allocation2] sm:$0xff]
      %v301 = vsel %vm299, %v290, 0.0
      %v302 = vadd.f32 %v300, %v301
      %303 = vst.msk [vmem:[#allocation2] sm:$0xff] %vm44, %v302
    $region45: #{tpu_custom_call.1} parent=1 // pred_fallthru
      _
    %s304 = sadd.s32 %s36, 7
    %p305 = scmp.lt.s32.totalorder %s304, 8
    // Predicated region
    $region46: #{tpu_custom_call.1} parent=1 // pred_check
      %p306 = pneg %p305
    $region47: #{tpu_custom_call.1} parent=1 // pred_check_branch
      %308 = sbr.rel (%p306) target = $region49
    $region48: #{tpu_custom_call.1} parent=1 // pred_region
      %s309 = scalar_lea.vmem [#allocation3], %s304
      %v310 = vld [vmem:[%s309] sm:$0x1]
      %s311 = scalar_lea.vmem [#allocation6], %s304
      %v312 = vld [vmem:[%s311] sm:$0x1]
      %v313 = vlaneseq
      %v314 = vshrl.u32 %v313, 7
      %v315 = vsub.s32 0, %v314
      %v316 = vrot.slane %v312, %v315
      %v317 = vsub.f32 %v38, %v316
      %v318 = vlaneseq
      %v319 = vshrl.u32 %v318, 7
      %v320 = vsub.s32 0, %v319
      %v321 = vrot.slane %v310, %v320
      %v322 = vsub.f32 %v37, %v321
      %v323 = vsub.f32 %v322, %v317
      %vm324 = vcmp.lt.f32.partialorder %v317, 0.0
      %v325 = vsub.f32 0.0, %v323
      %v326 = vsel %vm324, %v323, %v325
      %v327 = vmax.f32 %v326, 0.0
      %v328 = vstv %s304
      %vm329 = vcmp.gt.s32.totalorder %v40, %v328
      %v330 = vsel %vm329, 1, 0
      %vm331 = vcmp.eq.s32.totalorder %v330, 1
      %vm332 = vmand %vm43, %vm331
      %vm333 = vcmp.ne.s32.totalorder %v42, %v328
      %v334 = vsel %vm333, 1, 0
      %vm335 = vcmp.eq.s32.totalorder %v334, 1
      %vm336 = vmand %vm332, %vm335
      %v337 = vld [vmem:[#allocation2] sm:$0xff]
      %v338 = vsel %vm336, %v327, 0.0
      %v339 = vadd.f32 %v337, %v338
      %340 = vst.msk [vmem:[#allocation2] sm:$0xff] %vm44, %v339
    $region49: #{tpu_custom_call.1} parent=1 // pred_fallthru
      _
    %v341 = vld [vmem:[#allocation2] sm:$0xff]
    %v342 = vsel %vm44, %v341, 0.0
    %343 = vadd.xlane.f32.xlu0 %v342
    %v344 = vpop.xlane.xlu0 %343
    %v345 = vrot.slane %v344, 4
    %v346 = vadd.f32 %v344, %v345
    %v347 = vrot.slane %v346, 2
    %v348 = vadd.f32 %v346, %v347
    %v349 = vrot.slane %v348, 1
    %v350 = vadd.f32 %v348, %v349
    %351 = vst [vmem:[#allocation8] sm:$0xff] %v350
    // Predicated region
    $region50: #{tpu_custom_call.1} parent=1 // pred_check
      _
    $region51: #{tpu_custom_call.1} parent=1 // pred_check_branch
      %353 = sbr.rel (0) target = $region53
    $region52: #{tpu_custom_call.1} parent=1 // pred_region
      %s355 = ssub.s32 128, 128
      %356 = vsyncadd [#allocation5], %s355
      %s358 = sshll.u32 [#allocation8], 4
      %s359 = int_to_ptr.vmem [resolvable:$true] %s358
      %361 = dma.vmem_to_hbm [thread:$0]  %s359, 128, %s2, [#allocation5]
    $region53: #{tpu_custom_call.1} parent=1 // pred_fallthru
      _
    // Predicated region
    $region54: #{tpu_custom_call.1} parent=1 // pred_check
      _
    $region55: #{tpu_custom_call.1} parent=1 // pred_check_branch
      %363 = sbr.rel (0) target = $region57
    $region56: #{tpu_custom_call.1} parent=1 // pred_region
      %364 = dma.done [#allocation5], 128
    $region57: #{tpu_custom_call.1} parent=1 // pred_fallthru
      _
    %365 = vsyncpa [#allocation4], 1
    %366 = vsyncpa [#allocation7], 1
    %367 = vsyncpa [#allocation5], 1

</llo_original>
